<compile_context>
chip_gen: v5e
topology: v5e:2x2
jax: 0.10.0
libtpu: 0.0.40
codegen_flags: <defaults>
</compile_context>

<pallas_src>
import functools

import numpy as np
import jax
import jax.numpy as jnp
from jax.experimental import pallas as pl
from jax.experimental.pallas import tpu as pltpu


# ----------------------------------------------------------------------------
# Fused QNet kernel: pooling + input_proj + seq-mixer stand-in + fused heads
# ----------------------------------------------------------------------------
def qnet_kernel(se_ref,                               # (1, S_pad, 2) int32 [start|end]
                tgt_ref, dec_ref,                     # (1, L, D_in) f32 each
                w_in_ref, b_in_ref,                   # (D_in, H), (1, H)
                w_mix_ref, b_mix_ref,                 # (H, H), (1, H)
                w_head_ref, b_head_ref,               # (H, 2Z), (1, 2Z)
                out_ref):                             # (1, S_pad, 2Z)
  _, L, _ = tgt_ref.shape
  _, S_pad, _ = se_ref.shape

  se = se_ref[0]                                      # (S_pad, 2) int32
  starts = se[:, 0:1]                                 # (S_pad, 1)
  ends = se[:, 1:2]                                   # (S_pad, 1)
  tgt = tgt_ref[0]                                    # (L, D_in)
  dec = dec_ref[0]                                    # (L, D_in)

  # Selection matrices: for segment s, context positions are [0, start_s) (taken
  # from the correct/target tokens) and the full pooled span is [0, end_s)
  # (decoder tokens on [start_s, end_s)).
  pos = jax.lax.broadcasted_iota(jnp.int32, (S_pad, L), 1)
  a_ctx = (pos < starts).astype(jnp.float32)          # (S_pad, L)
  a_all = (pos < ends).astype(jnp.float32)            # (S_pad, L)

  # Pool all segments at once in input space (two MXU matmuls):
  #   seg_sum[s] = sum_{t<start} tgt[t] + sum_{start<=t<end} dec[t]
  seg_sum = (jnp.dot(a_ctx, tgt - dec, preferred_element_type=jnp.float32)
             + jnp.dot(a_all, dec, preferred_element_type=jnp.float32))  # (S_pad, D_in)

  ends_f = ends.astype(jnp.float32)
  inv_len = 1.0 / jnp.maximum(ends_f, 1.0)            # (S_pad, 1)
  valid = (ends > 0).astype(jnp.float32)              # (S_pad, 1)  padded rows -> 0

  # input_proj on the pooled means: mean_t(x @ W + b) == (mean_t x) @ W + b.
  pooled = (jnp.dot(seg_sum, w_in_ref[...], preferred_element_type=jnp.float32)
            * inv_len + b_in_ref[...])                # (S_pad, H)

  # TODO(synk): stand-in for the external Encoder seq_mixer (pooled causal state
  # at the last position + SiLU-gated MLP with residual).
  mix = (jnp.dot(pooled, w_mix_ref[...], preferred_element_type=jnp.float32)
         + b_mix_ref[...])
  h = pooled + mix * jax.nn.sigmoid(mix)              # (S_pad, H)

  # Fused mu|logvar head: single matmul, packed output; mask padded segment rows
  # to exact zeros.
  out = (jnp.dot(h, w_head_ref[...], preferred_element_type=jnp.float32)
         + b_head_ref[...]) * valid                   # (S_pad, 2Z)
  out_ref[0] = out


# ----------------------------------------------------------------------------
# QNet forward (wrapper) — one pallas_call for the whole forward pass (jitted)
# ----------------------------------------------------------------------------
@jax.jit
def qnet_forward(decoder_output, targets, start_end, params):
  """Returns zero-padded (B, S_pad, latent_dim) mu_q / logvar_q (the PyTorch
  module returns ragged Python lists; validity is derived in-kernel from
  end > 0, so padded segment rows come back as exact zeros)."""
  B, L, D_in = targets.shape
  H = params["w_in"].shape[1]
  Z = params["w_mu"].shape[1]
  S_pad = start_end.shape[1]

  # Fuse mu/logvar heads into one (H, 2Z) weight -> one matmul, 2x lane width.
  w_head = jnp.concatenate([params["w_mu"], params["w_lv"]], axis=1)   # (H, 2Z)
  b_head = jnp.concatenate([params["b_mu"], params["b_lv"]], axis=1)   # (1, 2Z)

  per_batch3 = lambda b: (b, 0, 0)
  full2 = lambda b: (0, 0)

  out = pl.pallas_call(
      qnet_kernel,
      out_shape=jax.ShapeDtypeStruct((B, S_pad, 2 * Z), jnp.float32),
      grid=(B,),
      in_specs=[
          pl.BlockSpec((1, S_pad, 2), per_batch3),    # packed [start|end]
          pl.BlockSpec((1, L, D_in), per_batch3),     # targets
          pl.BlockSpec((1, L, D_in), per_batch3),     # decoder_output
          pl.BlockSpec((D_in, H), full2),             # w_in
          pl.BlockSpec((1, H), full2),                # b_in
          pl.BlockSpec((H, H), full2),                # w_mix
          pl.BlockSpec((1, H), full2),                # b_mix
          pl.BlockSpec((H, 2 * Z), full2),            # w_head (mu|lv fused)
          pl.BlockSpec((1, 2 * Z), full2),            # b_head
      ],
      out_specs=pl.BlockSpec((1, S_pad, 2 * Z), per_batch3),
      compiler_params=pltpu.CompilerParams(dimension_semantics=("parallel",)),
  )(start_end, targets, decoder_output,
    params["w_in"], params["b_in"],
    params["w_mix"], params["b_mix"],
    w_head, b_head)

  mu_q = out[:, :, :Z]
  logvar_q = out[:, :, Z:]
  return mu_q, logvar_q


# ----------------------------------------------------------------------------
# Host glue: bitmask -> packed [start | exclusive-end] indices, padded to x8
# ----------------------------------------------------------------------------
def segmentation_to_indices(segmentation_indices, pad_to=8):
  seg = np.asarray(segmentation_indices)[..., 0].astype(bool)   # (B, L)
  B = seg.shape[0]
  starts_l, ends_l = [], []
  for b in range(B):
    end_pos = np.nonzero(seg[b])[0]
    ends = (end_pos + 1).astype(np.int32)            # exclusive ends
    starts = np.concatenate([[0], ends[:-1]]).astype(np.int32)
    starts_l.append(starts)
    ends_l.append(ends)
  nseg = np.array([len(s) for s in starts_l], dtype=np.int32)
  S_max = int(nseg.max())
  S_pad = ((S_max + pad_to - 1) // pad_to) * pad_to  # sublane-dense segment axis
  start_end = np.zeros((B, S_pad, 2), np.int32)
  for b in range(B):
    start_end[b, :nseg[b], 0] = starts_l[b]
    start_end[b, :nseg[b], 1] = ends_l[b]
  return jnp.asarray(start_end), jnp.asarray(nseg)


# ----------------------------------------------------------------------------
# Pure-numpy reference (mirrors the PyTorch loop structure)
# ----------------------------------------------------------------------------
def reference(decoder_output, targets, start_end, nseg, params):
  dec = np.asarray(decoder_output); tgt = np.asarray(targets)
  se = np.asarray(start_end)
  p = {k: np.asarray(v) for k, v in params.items()}
  corr = tgt @ p["w_in"] + p["b_in"]
  demb = dec @ p["w_in"] + p["b_in"]
  B = corr.shape[0]
  S_pad = se.shape[1]
  Z = p["w_mu"].shape[1]
  mu_o = np.zeros((B, S_pad, Z), np.float32)
  lv_o = np.zeros((B, S_pad, Z), np.float32)
  for b in range(B):
    for s in range(int(nseg[b])):
      st, en = int(se[b, s, 0]), int(se[b, s, 1])
      full_seq = np.concatenate([corr[b, :st], demb[b, st:en]], axis=0)
      pooled = full_seq.mean(axis=0)
      mix = pooled @ p["w_mix"] + p["b_mix"][0]
      h = pooled + mix * (1.0 / (1.0 + np.exp(-mix)))
      mu_o[b, s] = h @ p["w_mu"] + p["b_mu"][0]
      lv_o[b, s] = h @ p["w_lv"] + p["b_lv"][0]
  return mu_o, lv_o


# ----------------------------------------------------------------------------
if __name__ == "__main__":
  B, L = 2, 16
  INPUT_DIM = 8          # continuous inputs -> input_proj path
  HIDDEN_DIM = 32        # qnet_config['qnet_hidden_dim']
  LATENT_DIM = 16

  key = jax.random.PRNGKey(0)
  keys = jax.random.split(key, 10)

  params = {
      "w_in":  0.05 * jax.random.normal(keys[0], (INPUT_DIM, HIDDEN_DIM), jnp.float32),
      "b_in":  0.05 * jax.random.normal(keys[1], (1, HIDDEN_DIM), jnp.float32),
      "w_mix": 0.05 * jax.random.normal(keys[2], (HIDDEN_DIM, HIDDEN_DIM), jnp.float32),
      "b_mix": 0.05 * jax.random.normal(keys[3], (1, HIDDEN_DIM), jnp.float32),
      "w_mu":  0.05 * jax.random.normal(keys[4], (HIDDEN_DIM, LATENT_DIM), jnp.float32),
      "b_mu":  0.05 * jax.random.normal(keys[5], (1, LATENT_DIM), jnp.float32),
      "w_lv":  0.05 * jax.random.normal(keys[6], (HIDDEN_DIM, LATENT_DIM), jnp.float32),
      "b_lv":  0.05 * jax.random.normal(keys[7], (1, LATENT_DIM), jnp.float32),
  }

  decoder_output = jax.random.normal(keys[8], (B, L, INPUT_DIM), jnp.float32)
  targets = jax.random.normal(keys[9], (B, L, INPUT_DIM), jnp.float32)

  # segmentation_indices: (B, L, 1) binary mask of segment END positions.
  seg_np = np.zeros((B, L, 1), np.float32)
  seg_np[0, [4, 9, 15], 0] = 1.0     # batch 0: 3 subsequences
  seg_np[1, [7, 15], 0] = 1.0        # batch 1: 2 subsequences
  segmentation_indices = jnp.asarray(seg_np)

  start_end, nseg = segmentation_to_indices(segmentation_indices)

  mu_q, logvar_q = qnet_forward(decoder_output, targets, start_end, params)
  mu_q = jax.block_until_ready(mu_q)
  logvar_q = jax.block_until_ready(logvar_q)

  mu_ref, lv_ref = reference(decoder_output, targets,
                             np.asarray(start_end), np.asarray(nseg), params)
  np.testing.assert_allclose(np.asarray(mu_q), mu_ref, rtol=1e-4, atol=2e-5)
  np.testing.assert_allclose(np.asarray(logvar_q), lv_ref, rtol=1e-4, atol=2e-5)

  print("KERNEL_OK")
</pallas_src>

<mosaic_0001>
module attributes {stable_mosaic.version = 11 : i64} {
  func.func @qnet_kernel(%arg0: i32, %arg1: memref<1x8x2xi32, #tpu.memory_space<vmem>>, %arg2: memref<1x16x8xf32, #tpu.memory_space<vmem>>, %arg3: memref<1x16x8xf32, #tpu.memory_space<vmem>>, %arg4: memref<8x32xf32, #tpu.memory_space<vmem>>, %arg5: memref<1x32xf32, #tpu.memory_space<vmem>>, %arg6: memref<32x32xf32, #tpu.memory_space<vmem>>, %arg7: memref<1x32xf32, #tpu.memory_space<vmem>>, %arg8: memref<32x32xf32, #tpu.memory_space<vmem>>, %arg9: memref<1x32xf32, #tpu.memory_space<vmem>>, %arg10: memref<1x8x32xf32, #tpu.memory_space<vmem>>) attributes {dimension_semantics = [#tpu.dimension_semantics<parallel>], iteration_bounds = array<i64: 2>, scalar_prefetch = 0 : i64, scratch_operands = 0 : i64, tpu.core_type = #tpu.core_type<tc>, window_params = [{transform_indices = @transform_0, window_bounds = array<i64: 1, 8, 2>}, {transform_indices = @transform_1, window_bounds = array<i64: 1, 16, 8>}, {transform_indices = @transform_2, window_bounds = array<i64: 1, 16, 8>}, {pipeline_mode = #tpu.pipeline_mode<synchronous>, transform_indices = @transform_3, window_bounds = array<i64: 8, 32>}, {pipeline_mode = #tpu.pipeline_mode<synchronous>, transform_indices = @transform_4, window_bounds = array<i64: 1, 32>}, {pipeline_mode = #tpu.pipeline_mode<synchronous>, transform_indices = @transform_5, window_bounds = array<i64: 32, 32>}, {pipeline_mode = #tpu.pipeline_mode<synchronous>, transform_indices = @transform_6, window_bounds = array<i64: 1, 32>}, {pipeline_mode = #tpu.pipeline_mode<synchronous>, transform_indices = @transform_7, window_bounds = array<i64: 32, 32>}, {pipeline_mode = #tpu.pipeline_mode<synchronous>, transform_indices = @transform_8, window_bounds = array<i64: 1, 32>}, {transform_indices = @transform_9, window_bounds = array<i64: 1, 8, 32>}]} {
    %c0 = arith.constant 0 : index
    %c0_0 = arith.constant 0 : index
    %c0_1 = arith.constant 0 : index
    %0 = vector.load %arg1[%c0, %c0_0, %c0_1] : memref<1x8x2xi32, #tpu.memory_space<vmem>>, vector<1x8x2xi32>
    %1 = vector.shape_cast %0 : vector<1x8x2xi32> to vector<8x2xi32>
    %2 = vector.extract_strided_slice %1 {offsets = [0, 0], sizes = [8, 1], strides = [1, 1]} : vector<8x2xi32> to vector<8x1xi32>
    %3 = vector.extract_strided_slice %1 {offsets = [0, 1], sizes = [8, 1], strides = [1, 1]} : vector<8x2xi32> to vector<8x1xi32>
    %c0_2 = arith.constant 0 : index
    %c0_3 = arith.constant 0 : index
    %c0_4 = arith.constant 0 : index
    %4 = vector.load %arg2[%c0_2, %c0_3, %c0_4] : memref<1x16x8xf32, #tpu.memory_space<vmem>>, vector<1x16x8xf32>
    %5 = vector.shape_cast %4 : vector<1x16x8xf32> to vector<16x8xf32>
    %c0_5 = arith.constant 0 : index
    %c0_6 = arith.constant 0 : index
    %c0_7 = arith.constant 0 : index
    %6 = vector.load %arg3[%c0_5, %c0_6, %c0_7] : memref<1x16x8xf32, #tpu.memory_space<vmem>>, vector<1x16x8xf32>
    %7 = vector.shape_cast %6 : vector<1x16x8xf32> to vector<16x8xf32>
    %8 = tpu.iota {dimensions = array<i32: 1>} : vector<8x16xi32>
    %9 = vector.broadcast %2 : vector<8x1xi32> to vector<8x16xi32>
    %10 = arith.cmpi slt, %8, %9 : vector<8x16xi32>
    %11 = arith.extui %10 : vector<8x16xi1> to vector<8x16xi32>
    %12 = arith.sitofp %11 : vector<8x16xi32> to vector<8x16xf32>
    %13 = vector.broadcast %3 : vector<8x1xi32> to vector<8x16xi32>
    %14 = arith.cmpi slt, %8, %13 : vector<8x16xi32>
    %15 = arith.extui %14 : vector<8x16xi1> to vector<8x16xi32>
    %16 = arith.sitofp %15 : vector<8x16xi32> to vector<8x16xf32>
    %17 = arith.subf %5, %7 : vector<16x8xf32>
    %cst = arith.constant dense<0.000000e+00> : vector<8x8xf32>
    %18 = tpu.matmul %12, %17, %cst {dimension_numbers = #tpu.dot_dimension_numbers<[1], [0], [0], [1], [0, 0, 1, 1], [], []>} : vector<8x16xf32>, vector<16x8xf32>, vector<8x8xf32> -> vector<8x8xf32>
    %cst_8 = arith.constant dense<0.000000e+00> : vector<8x8xf32>
    %19 = tpu.matmul %16, %7, %cst_8 {dimension_numbers = #tpu.dot_dimension_numbers<[1], [0], [0], [1], [0, 0, 1, 1], [], []>} : vector<8x16xf32>, vector<16x8xf32>, vector<8x8xf32> -> vector<8x8xf32>
    %20 = arith.addf %18, %19 : vector<8x8xf32>
    %21 = arith.sitofp %3 : vector<8x1xi32> to vector<8x1xf32>
    %cst_9 = arith.constant 1.000000e+00 : f32
    %22 = vector.broadcast %cst_9 : f32 to vector<8x1xf32>
    %23 = arith.maximumf %21, %22 : vector<8x1xf32>
    %cst_10 = arith.constant 1.000000e+00 : f32
    %24 = vector.broadcast %cst_10 : f32 to vector<8x1xf32>
    %25 = arith.divf %24, %23 : vector<8x1xf32>
    %c0_i32 = arith.constant 0 : i32
    %26 = vector.broadcast %c0_i32 : i32 to vector<8x1xi32>
    %27 = arith.cmpi sgt, %3, %26 : vector<8x1xi32>
    %28 = arith.extui %27 : vector<8x1xi1> to vector<8x1xi32>
    %29 = arith.sitofp %28 : vector<8x1xi32> to vector<8x1xf32>
    %c0_11 = arith.constant 0 : index
    %c0_12 = arith.constant 0 : index
    %30 = vector.load %arg4[%c0_11, %c0_12] : memref<8x32xf32, #tpu.memory_space<vmem>>, vector<8x32xf32>
    %cst_13 = arith.constant dense<0.000000e+00> : vector<8x32xf32>
    %31 = tpu.matmul %20, %30, %cst_13 {dimension_numbers = #tpu.dot_dimension_numbers<[1], [0], [0], [1], [0, 0, 1, 1], [], []>} : vector<8x8xf32>, vector<8x32xf32>, vector<8x32xf32> -> vector<8x32xf32>
    %32 = vector.broadcast %25 : vector<8x1xf32> to vector<8x32xf32>
    %33 = arith.mulf %31, %32 : vector<8x32xf32>
    %c0_14 = arith.constant 0 : index
    %c0_15 = arith.constant 0 : index
    %34 = vector.load %arg5[%c0_14, %c0_15] : memref<1x32xf32, #tpu.memory_space<vmem>>, vector<1x32xf32>
    %35 = vector.broadcast %34 : vector<1x32xf32> to vector<8x32xf32>
    %36 = arith.addf %33, %35 : vector<8x32xf32>
    %c0_16 = arith.constant 0 : index
    %c0_17 = arith.constant 0 : index
    %37 = vector.load %arg6[%c0_16, %c0_17] : memref<32x32xf32, #tpu.memory_space<vmem>>, vector<32x32xf32>
    %cst_18 = arith.constant dense<0.000000e+00> : vector<8x32xf32>
    %38 = tpu.matmul %36, %37, %cst_18 {dimension_numbers = #tpu.dot_dimension_numbers<[1], [0], [0], [1], [0, 0, 1, 1], [], []>} : vector<8x32xf32>, vector<32x32xf32>, vector<8x32xf32> -> vector<8x32xf32>
    %c0_19 = arith.constant 0 : index
    %c0_20 = arith.constant 0 : index
    %39 = vector.load %arg7[%c0_19, %c0_20] : memref<1x32xf32, #tpu.memory_space<vmem>>, vector<1x32xf32>
    %40 = vector.broadcast %39 : vector<1x32xf32> to vector<8x32xf32>
    %41 = arith.addf %38, %40 : vector<8x32xf32>
    %42 = arith.negf %41 : vector<8x32xf32>
    %43 = math.exp %42 : vector<8x32xf32>
    %cst_21 = arith.constant 1.000000e+00 : f32
    %44 = vector.broadcast %cst_21 : f32 to vector<8x32xf32>
    %45 = arith.addf %44, %43 : vector<8x32xf32>
    %46 = arith.divf %44, %45 : vector<8x32xf32>
    %47 = arith.mulf %41, %46 : vector<8x32xf32>
    %48 = arith.addf %36, %47 : vector<8x32xf32>
    %c0_22 = arith.constant 0 : index
    %c0_23 = arith.constant 0 : index
    %49 = vector.load %arg8[%c0_22, %c0_23] : memref<32x32xf32, #tpu.memory_space<vmem>>, vector<32x32xf32>
    %cst_24 = arith.constant dense<0.000000e+00> : vector<8x32xf32>
    %50 = tpu.matmul %48, %49, %cst_24 {dimension_numbers = #tpu.dot_dimension_numbers<[1], [0], [0], [1], [0, 0, 1, 1], [], []>} : vector<8x32xf32>, vector<32x32xf32>, vector<8x32xf32> -> vector<8x32xf32>
    %c0_25 = arith.constant 0 : index
    %c0_26 = arith.constant 0 : index
    %51 = vector.load %arg9[%c0_25, %c0_26] : memref<1x32xf32, #tpu.memory_space<vmem>>, vector<1x32xf32>
    %52 = vector.broadcast %51 : vector<1x32xf32> to vector<8x32xf32>
    %53 = arith.addf %50, %52 : vector<8x32xf32>
    %54 = vector.broadcast %29 : vector<8x1xf32> to vector<8x32xf32>
    %55 = arith.mulf %53, %54 : vector<8x32xf32>
    %c0_27 = arith.constant 0 : index
    %c0_28 = arith.constant 0 : index
    %c0_29 = arith.constant 0 : index
    %56 = vector.load %arg10[%c0_27, %c0_28, %c0_29] : memref<1x8x32xf32, #tpu.memory_space<vmem>>, vector<1x8x32xf32>
    %57 = vector.shape_cast %56 : vector<1x8x32xf32> to vector<8x32xf32>
    %58 = vector.shape_cast %55 : vector<8x32xf32> to vector<1x8x32xf32>
    tpu.vector_store %arg10[%c0_27, %c0_28, %c0_29], %58 {strides = array<i32>} : memref<1x8x32xf32, #tpu.memory_space<vmem>>, vector<1x8x32xf32>,
    return
  }
  func.func @transform_0(%arg0: i32) -> (i32, i32, i32) {
    %c0_i32 = arith.constant 0 : i32
    %c0_i32_0 = arith.constant 0 : i32
    %c0_i32_1 = arith.constant 0 : i32
    return %arg0, %c0_i32, %c0_i32_0 : i32, i32, i32
  }
  func.func @transform_1(%arg0: i32) -> (i32, i32, i32) {
    %c0_i32 = arith.constant 0 : i32
    %c0_i32_0 = arith.constant 0 : i32
    %c0_i32_1 = arith.constant 0 : i32
    return %arg0, %c0_i32, %c0_i32_0 : i32, i32, i32
  }
  func.func @transform_2(%arg0: i32) -> (i32, i32, i32) {
    %c0_i32 = arith.constant 0 : i32
    %c0_i32_0 = arith.constant 0 : i32
    %c0_i32_1 = arith.constant 0 : i32
    return %arg0, %c0_i32, %c0_i32_0 : i32, i32, i32
  }
  func.func @transform_3(%arg0: i32) -> (i32, i32) {
    %c0_i32 = arith.constant 0 : i32
    %c0_i32_0 = arith.constant 0 : i32
    %c0_i32_1 = arith.constant 0 : i32
    return %c0_i32, %c0_i32_0 : i32, i32
  }
  func.func @transform_4(%arg0: i32) -> (i32, i32) {
    %c0_i32 = arith.constant 0 : i32
    %c0_i32_0 = arith.constant 0 : i32
    %c0_i32_1 = arith.constant 0 : i32
    return %c0_i32, %c0_i32_0 : i32, i32
  }
  func.func @transform_5(%arg0: i32) -> (i32, i32) {
    %c0_i32 = arith.constant 0 : i32
    %c0_i32_0 = arith.constant 0 : i32
    %c0_i32_1 = arith.constant 0 : i32
    return %c0_i32, %c0_i32_0 : i32, i32
  }
  func.func @transform_6(%arg0: i32) -> (i32, i32) {
    %c0_i32 = arith.constant 0 : i32
    %c0_i32_0 = arith.constant 0 : i32
    %c0_i32_1 = arith.constant 0 : i32
    return %c0_i32, %c0_i32_0 : i32, i32
  }
  func.func @transform_7(%arg0: i32) -> (i32, i32) {
    %c0_i32 = arith.constant 0 : i32
    %c0_i32_0 = arith.constant 0 : i32
    %c0_i32_1 = arith.constant 0 : i32
    return %c0_i32, %c0_i32_0 : i32, i32
  }
  func.func @transform_8(%arg0: i32) -> (i32, i32) {
    %c0_i32 = arith.constant 0 : i32
    %c0_i32_0 = arith.constant 0 : i32
    %c0_i32_1 = arith.constant 0 : i32
    return %c0_i32, %c0_i32_0 : i32, i32
  }
  func.func @transform_9(%arg0: i32) -> (i32, i32, i32) {
    %c0_i32 = arith.constant 0 : i32
    %c0_i32_0 = arith.constant 0 : i32
    %c0_i32_1 = arith.constant 0 : i32
    return %arg0, %c0_i32, %c0_i32_0 : i32, i32, i32
  }
}

</mosaic_0001>

<llo_original>
// kernel: qnet_forward.1
$region0: #{qnet_forward.1}
  #allocation0 [shape = 'u32[]', space=smem, size = 0x4, offset = 0x4, fixed_abs, tag = 'smem constant byte address 0x4 - core index']
  #allocation1 [shape = 'u32[72,128]{1,0:T(1,128)}', space=vmem, size = 0x9000, scoped, tag = 'internal scratch']
  %s0 = inlined_call_operand.vmem [shape: s32[2,8,2], index: 0, kind: input, shape index: {}]
  %s1 = inlined_call_operand.vmem [shape: f32[2,16,8], index: 1, kind: input, shape index: {}]
  %s2 = inlined_call_operand.vmem [shape: f32[2,16,8], index: 2, kind: input, shape index: {}]
  %s3 = inlined_call_operand.vmem [shape: f32[8,32], index: 3, kind: input, shape index: {}]
  %s4 = inlined_call_operand.vmem [shape: f32[1,32], index: 4, kind: input, shape index: {}]
  %s5 = inlined_call_operand.vmem [shape: f32[32,32], index: 5, kind: input, shape index: {}]
  %s6 = inlined_call_operand.vmem [shape: f32[1,32], index: 6, kind: input, shape index: {}]
  %s7 = inlined_call_operand.vmem [shape: f32[32,32], index: 7, kind: input, shape index: {}]
  %s8 = inlined_call_operand.vmem [shape: f32[1,32], index: 8, kind: input, shape index: {}]
  %s9 = inlined_call_operand.vmem [shape: f32[2,8,32], index: 9, kind: output, shape index: {}]
  %s10 = sld [smem:[#allocation0]]
  $region69: #{qnet_forward.1} parent=0
    _
  %s12 = ssub.s32 1, %s10
  %s13 = scalar_select 0, %s12, %s10
  loop: start=0, step=1, limit=4
  $region2: #{qnet_forward.1} parent=0 // loop_pre_header
    _
  $region3: #{qnet_forward.1} parent=0 // loop_header
    %s15 = sphi 0, %s19
    %p16 = scmp.ge.s32.totalorder %s15, 4
    %s25 = sphi 0, %s27
    %s28 = sphi 0, %s25
    %s29 = sphi 0, %s28
    %s45 = sphi 0, %s29
    %s51 = sphi 0, %s53
    %s54 = sphi 0, %s51
    %s55 = sphi 0, %s54
    %s71 = sphi 0, %s55
    %s77 = sphi 0, %s79
    %s80 = sphi 0, %s77
    %s81 = sphi 0, %s80
    %s97 = sphi 0, %s81
    %s101 = sphi 0, %s101
    %s103 = sphi 0, %s101
    %s104 = sphi 0, %s103
    %s118 = sphi 0, %s104
    %s122 = sphi 0, %s122
    %s124 = sphi 0, %s122
    %s125 = sphi 0, %s124
    %s139 = sphi 0, %s125
    %s143 = sphi 0, %s143
    %s145 = sphi 0, %s143
    %s146 = sphi 0, %s145
    %s160 = sphi 0, %s146
    %s164 = sphi 0, %s164
    %s166 = sphi 0, %s164
    %s167 = sphi 0, %s166
    %s181 = sphi 0, %s167
    %s185 = sphi 0, %s185
    %s187 = sphi 0, %s185
    %s188 = sphi 0, %s187
    %s202 = sphi 0, %s188
    %s206 = sphi 0, %s206
    %s208 = sphi 0, %s206
    %s209 = sphi 0, %s208
    %s223 = sphi 0, %s209
    %s229 = sphi 0, %s231
    %s232 = sphi 0, %s229
    %s233 = sphi 0, %s232
    %s249 = sphi 0, %s233
  $region4: #{qnet_forward.1} parent=0 // loop_header_branch
    %18 = sbr.rel (%p16) target = $region8
  $region5: #{qnet_forward.1} parent=0 // loop_body
    %s20 = ssub.s32 %s15, 1
    %s21 = ssub.s32 %s15, 2
    %s22 = sadd.s32 %s15, 1
    %s23 = ssub.s32 %s15, %s22
    %p24 = scmp.eq.s32.totalorder %s23, 0
    %s26 = sadd.s32 %s25, 1
    %s27 = scalar_select %p24, %s25, %s26
    %p30 = pneg %p24
    %p31 = scmp.eq.s32.totalorder %s15, 1
    %p32 = por %p30, %p31
    %p33 = scmp.ne.s32.totalorder %s25, %s28
    %p34 = scmp.eq.s32.totalorder %s15, 0
    %p35 = por %p33, %p34
    %p36 = scmp.ne.s32.totalorder %s25, %s28
    %p37 = scmp.eq.s32.totalorder %s20, 1
    %p38 = por %p36, %p37
    %p39 = scmp.ne.s32.totalorder %s28, %s29
    %p40 = scmp.eq.s32.totalorder %s20, 0
    %p41 = por %p39, %p40
    %p42 = scmp.ne.s32.totalorder %s28, %s29
    %p43 = scmp.eq.s32.totalorder %s21, 1
    %p44 = por %p42, %p43
    %p46 = scmp.ne.s32.totalorder %s29, %s45
    %p47 = scmp.eq.s32.totalorder %s21, 0
    %p48 = por %p46, %p47
    %s49 = ssub.s32 %s15, %s22
    %p50 = scmp.eq.s32.totalorder %s49, 0
    %s52 = sadd.s32 %s51, 1
    %s53 = scalar_select %p50, %s51, %s52
    %p56 = pneg %p50
    %p57 = scmp.eq.s32.totalorder %s15, 1
    %p58 = por %p56, %p57
    %p59 = scmp.ne.s32.totalorder %s51, %s54
    %p60 = scmp.eq.s32.totalorder %s15, 0
    %p61 = por %p59, %p60
    %p62 = scmp.ne.s32.totalorder %s51, %s54
    %p63 = scmp.eq.s32.totalorder %s20, 1
    %p64 = por %p62, %p63
    %p65 = scmp.ne.s32.totalorder %s54, %s55
    %p66 = scmp.eq.s32.totalorder %s20, 0
    %p67 = por %p65, %p66
    %p68 = scmp.ne.s32.totalorder %s54, %s55
    %p69 = scmp.eq.s32.totalorder %s21, 1
    %p70 = por %p68, %p69
    %p72 = scmp.ne.s32.totalorder %s55, %s71
    %p73 = scmp.eq.s32.totalorder %s21, 0
    %p74 = por %p72, %p73
    %s75 = ssub.s32 %s15, %s22
    %p76 = scmp.eq.s32.totalorder %s75, 0
    %s78 = sadd.s32 %s77, 1
    %s79 = scalar_select %p76, %s77, %s78
    %p82 = pneg %p76
    %p83 = scmp.eq.s32.totalorder %s15, 1
    %p84 = por %p82, %p83
    %p85 = scmp.ne.s32.totalorder %s77, %s80
    %p86 = scmp.eq.s32.totalorder %s15, 0
    %p87 = por %p85, %p86
    %p88 = scmp.ne.s32.totalorder %s77, %s80
    %p89 = scmp.eq.s32.totalorder %s20, 1
    %p90 = por %p88, %p89
    %p91 = scmp.ne.s32.totalorder %s80, %s81
    %p92 = scmp.eq.s32.totalorder %s20, 0
    %p93 = por %p91, %p92
    %p94 = scmp.ne.s32.totalorder %s80, %s81
    %p95 = scmp.eq.s32.totalorder %s21, 1
    %p96 = por %p94, %p95
    %p98 = scmp.ne.s32.totalorder %s81, %s97
    %p99 = scmp.eq.s32.totalorder %s21, 0
    %p100 = por %p98, %p99
    %s102 = sadd.s32 %s101, 1
    %p105 = scmp.eq.s32.totalorder %s15, 1
    %p106 = scmp.ne.s32.totalorder %s101, %s103
    %p107 = scmp.eq.s32.totalorder %s15, 0
    %p108 = por %p106, %p107
    %p109 = scmp.ne.s32.totalorder %s101, %s103
    %p110 = scmp.eq.s32.totalorder %s20, 1
    %p111 = por %p109, %p110
    %p112 = scmp.ne.s32.totalorder %s103, %s104
    %p113 = scmp.eq.s32.totalorder %s20, 0
    %p114 = por %p112, %p113
    %p115 = scmp.ne.s32.totalorder %s103, %s104
    %p116 = scmp.eq.s32.totalorder %s21, 1
    %p117 = por %p115, %p116
    %p119 = scmp.ne.s32.totalorder %s104, %s118
    %p120 = scmp.eq.s32.totalorder %s21, 0
    %p121 = por %p119, %p120
    %s123 = sadd.s32 %s122, 1
    %p126 = scmp.eq.s32.totalorder %s15, 1
    %p127 = scmp.ne.s32.totalorder %s122, %s124
    %p128 = scmp.eq.s32.totalorder %s15, 0
    %p129 = por %p127, %p128
    %p130 = scmp.ne.s32.totalorder %s122, %s124
    %p131 = scmp.eq.s32.totalorder %s20, 1
    %p132 = por %p130, %p131
    %p133 = scmp.ne.s32.totalorder %s124, %s125
    %p134 = scmp.eq.s32.totalorder %s20, 0
    %p135 = por %p133, %p134
    %p136 = scmp.ne.s32.totalorder %s124, %s125
    %p137 = scmp.eq.s32.totalorder %s21, 1
    %p138 = por %p136, %p137
    %p140 = scmp.ne.s32.totalorder %s125, %s139
    %p141 = scmp.eq.s32.totalorder %s21, 0
    %p142 = por %p140, %p141
    %s144 = sadd.s32 %s143, 1
    %p147 = scmp.eq.s32.totalorder %s15, 1
    %p148 = scmp.ne.s32.totalorder %s143, %s145
    %p149 = scmp.eq.s32.totalorder %s15, 0
    %p150 = por %p148, %p149
    %p151 = scmp.ne.s32.totalorder %s143, %s145
    %p152 = scmp.eq.s32.totalorder %s20, 1
    %p153 = por %p151, %p152
    %p154 = scmp.ne.s32.totalorder %s145, %s146
    %p155 = scmp.eq.s32.totalorder %s20, 0
    %p156 = por %p154, %p155
    %p157 = scmp.ne.s32.totalorder %s145, %s146
    %p158 = scmp.eq.s32.totalorder %s21, 1
    %p159 = por %p157, %p158
    %p161 = scmp.ne.s32.totalorder %s146, %s160
    %p162 = scmp.eq.s32.totalorder %s21, 0
    %p163 = por %p161, %p162
    %s165 = sadd.s32 %s164, 1
    %p168 = scmp.eq.s32.totalorder %s15, 1
    %p169 = scmp.ne.s32.totalorder %s164, %s166
    %p170 = scmp.eq.s32.totalorder %s15, 0
    %p171 = por %p169, %p170
    %p172 = scmp.ne.s32.totalorder %s164, %s166
    %p173 = scmp.eq.s32.totalorder %s20, 1
    %p174 = por %p172, %p173
    %p175 = scmp.ne.s32.totalorder %s166, %s167
    %p176 = scmp.eq.s32.totalorder %s20, 0
    %p177 = por %p175, %p176
    %p178 = scmp.ne.s32.totalorder %s166, %s167
    %p179 = scmp.eq.s32.totalorder %s21, 1
    %p180 = por %p178, %p179
    %p182 = scmp.ne.s32.totalorder %s167, %s181
    %p183 = scmp.eq.s32.totalorder %s21, 0
    %p184 = por %p182, %p183
    %s186 = sadd.s32 %s185, 1
    %p189 = scmp.eq.s32.totalorder %s15, 1
    %p190 = scmp.ne.s32.totalorder %s185, %s187
    %p191 = scmp.eq.s32.totalorder %s15, 0
    %p192 = por %p190, %p191
    %p193 = scmp.ne.s32.totalorder %s185, %s187
    %p194 = scmp.eq.s32.totalorder %s20, 1
    %p195 = por %p193, %p194
    %p196 = scmp.ne.s32.totalorder %s187, %s188
    %p197 = scmp.eq.s32.totalorder %s20, 0
    %p198 = por %p196, %p197
    %p199 = scmp.ne.s32.totalorder %s187, %s188
    %p200 = scmp.eq.s32.totalorder %s21, 1
    %p201 = por %p199, %p200
    %p203 = scmp.ne.s32.totalorder %s188, %s202
    %p204 = scmp.eq.s32.totalorder %s21, 0
    %p205 = por %p203, %p204
    %s207 = sadd.s32 %s206, 1
    %p210 = scmp.eq.s32.totalorder %s15, 1
    %p211 = scmp.ne.s32.totalorder %s206, %s208
    %p212 = scmp.eq.s32.totalorder %s15, 0
    %p213 = por %p211, %p212
    %p214 = scmp.ne.s32.totalorder %s206, %s208
    %p215 = scmp.eq.s32.totalorder %s20, 1
    %p216 = por %p214, %p215
    %p217 = scmp.ne.s32.totalorder %s208, %s209
    %p218 = scmp.eq.s32.totalorder %s20, 0
    %p219 = por %p217, %p218
    %p220 = scmp.ne.s32.totalorder %s208, %s209
    %p221 = scmp.eq.s32.totalorder %s21, 1
    %p222 = por %p220, %p221
    %p224 = scmp.ne.s32.totalorder %s209, %s223
    %p225 = scmp.eq.s32.totalorder %s21, 0
    %p226 = por %p224, %p225
    %s227 = ssub.s32 %s15, %s22
    %p228 = scmp.eq.s32.totalorder %s227, 0
    %s230 = sadd.s32 %s229, 1
    %s231 = scalar_select %p228, %s229, %s230
    %p234 = pneg %p228
    %p235 = scmp.eq.s32.totalorder %s15, 1
    %p236 = por %p234, %p235
    %p237 = scmp.ne.s32.totalorder %s229, %s232
    %p238 = scmp.eq.s32.totalorder %s15, 0
    %p239 = por %p237, %p238
    %p240 = scmp.ne.s32.totalorder %s229, %s232
    %p241 = scmp.eq.s32.totalorder %s20, 1
    %p242 = por %p240, %p241
    %p243 = scmp.ne.s32.totalorder %s232, %s233
    %p244 = scmp.eq.s32.totalorder %s20, 0
    %p245 = por %p243, %p244
    %p246 = scmp.ne.s32.totalorder %s232, %s233
    %p247 = scmp.eq.s32.totalorder %s21, 1
    %p248 = por %p246, %p247
    %p250 = scmp.ne.s32.totalorder %s233, %s249
    %p251 = scmp.eq.s32.totalorder %s21, 0
    %p252 = por %p250, %p251
    %p253 = scmp.le.s32.totalorder 1, %s15
    %p254 = scmp.lt.s32.totalorder %s15, 3
    %p255 = pnand %p253, %p254
    %p256 = pneg %p255
    // Predicated region
    $region9: #{qnet_forward.1} parent=5 // pred_check
      _
    $region10: #{qnet_forward.1} parent=5 // pred_check_branch
      %258 = sbr.rel (%p255) target = $region12
    $region11: #{qnet_forward.1} parent=5 // pred_region
      %s259 = ssub.s32 %s15, 1
      // Predicated region
      $region13: #{qnet_forward.1} parent=11 // pred_check
        %p260 = pneg %p114
      $region14: #{qnet_forward.1} parent=11 // pred_check_branch
        %262 = sbr.rel (%p260) target = $region16
      $region15: #{qnet_forward.1} parent=11 // pred_region
        _
      $region16: #{qnet_forward.1} parent=11 // pred_fallthru
        _
      // Predicated region
      $region17: #{qnet_forward.1} parent=11 // pred_check
        %p263 = pneg %p135
      $region18: #{qnet_forward.1} parent=11 // pred_check_branch
        %265 = sbr.rel (%p263) target = $region20
      $region19: #{qnet_forward.1} parent=11 // pred_region
        _
      $region20: #{qnet_forward.1} parent=11 // pred_fallthru
        _
      // Predicated region
      $region21: #{qnet_forward.1} parent=11 // pred_check
        %p266 = pneg %p156
      $region22: #{qnet_forward.1} parent=11 // pred_check_branch
        %268 = sbr.rel (%p266) target = $region24
      $region23: #{qnet_forward.1} parent=11 // pred_region
        _
      $region24: #{qnet_forward.1} parent=11 // pred_fallthru
        _
      // Predicated region
      $region25: #{qnet_forward.1} parent=11 // pred_check
        %p269 = pneg %p177
      $region26: #{qnet_forward.1} parent=11 // pred_check_branch
        %271 = sbr.rel (%p269) target = $region28
      $region27: #{qnet_forward.1} parent=11 // pred_region
        _
      $region28: #{qnet_forward.1} parent=11 // pred_fallthru
        _
      // Predicated region
      $region29: #{qnet_forward.1} parent=11 // pred_check
        %p272 = pneg %p198
      $region30: #{qnet_forward.1} parent=11 // pred_check_branch
        %274 = sbr.rel (%p272) target = $region32
      $region31: #{qnet_forward.1} parent=11 // pred_region
        _
      $region32: #{qnet_forward.1} parent=11 // pred_fallthru
        _
      // Predicated region
      $region33: #{qnet_forward.1} parent=11 // pred_check
        %p275 = pneg %p219
      $region34: #{qnet_forward.1} parent=11 // pred_check_branch
        %277 = sbr.rel (%p275) target = $region36
      $region35: #{qnet_forward.1} parent=11 // pred_region
        _
      $region36: #{qnet_forward.1} parent=11 // pred_fallthru
        _
    $region12: #{qnet_forward.1} parent=5 // pred_fallthru
      _
    %p278 = scmp.lt.s32.totalorder %s15, 2
    // Predicated region
    $region37: #{qnet_forward.1} parent=5 // pred_check
      %p279 = pneg %p278
    $region38: #{qnet_forward.1} parent=5 // pred_check_branch
      %281 = sbr.rel (%p279) target = $region40
    $region39: #{qnet_forward.1} parent=5 // pred_region
      // Predicated region
      $region41: #{qnet_forward.1} parent=39 // pred_check
        %p282 = pneg %p35
      $region42: #{qnet_forward.1} parent=39 // pred_check_branch
        %284 = sbr.rel (%p282) target = $region44
      $region43: #{qnet_forward.1} parent=39 // pred_region
        %p285 = scmp.lt.s32.totalorder %s15, 1
        %s286 = scalar_select %p285, %s15, 1
        %s287 = smul.addr %s286, 8
        %s288 = scalar_lea.vmem %s0, %s287
      $region44: #{qnet_forward.1} parent=39 // pred_fallthru
        _
      // Predicated region
      $region45: #{qnet_forward.1} parent=39 // pred_check
        %p289 = pneg %p61
      $region46: #{qnet_forward.1} parent=39 // pred_check_branch
        %291 = sbr.rel (%p289) target = $region48
      $region47: #{qnet_forward.1} parent=39 // pred_region
        %p292 = scmp.lt.s32.totalorder %s15, 1
        %s293 = scalar_select %p292, %s15, 1
        %s294 = smul.addr %s293, 2
        %s295 = smul.addr %s294, 8
        %s296 = scalar_lea.vmem %s1, %s295
      $region48: #{qnet_forward.1} parent=39 // pred_fallthru
        _
      // Predicated region
      $region49: #{qnet_forward.1} parent=39 // pred_check
        %p297 = pneg %p87
      $region50: #{qnet_forward.1} parent=39 // pred_check_branch
        %299 = sbr.rel (%p297) target = $region52
      $region51: #{qnet_forward.1} parent=39 // pred_region
        %p300 = scmp.lt.s32.totalorder %s15, 1
        %s301 = scalar_select %p300, %s15, 1
        %s302 = smul.addr %s301, 2
        %s303 = smul.addr %s302, 8
        %s304 = scalar_lea.vmem %s2, %s303
      $region52: #{qnet_forward.1} parent=39 // pred_fallthru
        _
    $region40: #{qnet_forward.1} parent=5 // pred_fallthru
      _
    %p305 = scmp.le.s32.totalorder 1, %s15
    %p306 = scmp.lt.s32.totalorder %s15, 3
    %p307 = pnand %p305, %p306
    %p308 = pneg %p307
    // Predicated region
    $region53: #{qnet_forward.1} parent=5 // pred_check
      _
    $region54: #{qnet_forward.1} parent=5 // pred_check_branch
      %310 = sbr.rel (%p307) target = $region56
    $region55: #{qnet_forward.1} parent=5 // pred_region
      %s311 = ssub.s32 %s15, 1
      %p312 = scmp.lt.s32.totalorder %s20, 1
      %s313 = scalar_select %p312, %s20, 1
      %s314 = smul.addr %s313, 8
      %s315 = scalar_lea.vmem %s0, %s314
      %p316 = pneg %p41
      %p317 = pneg %p38
      %p318 = scmp.lt.s32.totalorder %s20, 1
      %s319 = scalar_select %p318, %s20, 1
      %s320 = smul.addr %s319, 2
      %s321 = smul.addr %s320, 8
      %s322 = scalar_lea.vmem %s1, %s321
      %p323 = pneg %p67
      %p324 = pneg %p64
      %p325 = scmp.lt.s32.totalorder %s20, 1
      %s326 = scalar_select %p325, %s20, 1
      %s327 = smul.addr %s326, 2
      %s328 = smul.addr %s327, 8
      %s329 = scalar_lea.vmem %s2, %s328
      %p330 = pneg %p93
      %p331 = pneg %p90
      %p332 = pneg %p114
      %p333 = pneg %p111
      %p334 = pneg %p135
      %p335 = pneg %p132
      %p336 = pneg %p156
      %p337 = pneg %p153
      %p338 = pneg %p177
      %p339 = pneg %p174
      %p340 = pneg %p198
      %p341 = pneg %p195
      %p342 = pneg %p219
      %p343 = pneg %p216
      %p344 = pneg %p245
      %p345 = pneg %p242
      %p346 = scmp.lt.s32.totalorder %s20, 1
      %s347 = scalar_select %p346, %s20, 1
      %s348 = smul.addr %s347, 8
      %s349 = scalar_lea.vmem %s9, %s348
      %p350 = scmp.lt.s32.totalorder %s20, 1
      %s351 = scalar_select %p350, %s20, 1
      %s352 = smul.addr %s351, 8
      %s353 = scalar_lea.vmem %s0, %s352
      %p354 = scmp.lt.s32.totalorder %s20, 1
      %s355 = scalar_select %p354, %s20, 1
      %s356 = smul.addr %s355, 2
      %s357 = smul.addr %s356, 8
      %s358 = scalar_lea.vmem %s1, %s357
      %p359 = scmp.lt.s32.totalorder %s20, 1
      %s360 = scalar_select %p359, %s20, 1
      %s361 = smul.addr %s360, 2
      %s362 = smul.addr %s361, 8
      %s363 = scalar_lea.vmem %s2, %s362
      %p364 = scmp.lt.s32.totalorder %s20, 1
      %s365 = scalar_select %p364, %s20, 1
      %s366 = smul.addr %s365, 8
      %s367 = scalar_lea.vmem %s9, %s366
      %v368 = vld [vmem:[%s353] sm:$0xff]
      %v369 = vld [vmem:[%s358] sm:$0xff]
      %v370 = vld [vmem:[%s358 + $0x8] sm:$0xff]
      %v371 = vld [vmem:[%s363] sm:$0xff]
      %v372 = vld [vmem:[%s363 + $0x8] sm:$0xff]
      %v373 = vlaneseq
      %v374 = vand.u32 %v373, 127
      %375 = vset.pattern.permute.xlu0 0
      %376 = vperm.xlu0 %375, %v368
      %v377 = vpop.permute.xlu0 %376
      %vm378 = vcmp.lt.s32.totalorder %v374, %v377
      %v379 = vsel %vm378, 1, 0
      %v380 = vcvt.s32.f32 %v379
      %381 = vset.pattern.permute.xlu0 1
      %382 = vperm.xlu0 %381, %v368
      %v383 = vpop.permute.xlu0 %382
      %vm384 = vcmp.lt.s32.totalorder %v374, %v383
      %v385 = vsel %vm384, 1, 0
      %v386 = vcvt.s32.f32 %v385
      %v387 = vsub.f32 %v369, %v371
      %v388 = vsub.f32 %v370, %v372
      %vm389 = vcmask 130048
      %v391 = vsel %vm389, %v386, 0
      %393 = vmatpush.msra.mxu0 0.0
      %394 = vmatpush.msra.mxu0 0.0
      %395 = vmatpush.msra.mxu0 0.0
      %396 = vmatpush.msra.mxu0 0.0
      %397 = vmatpush.msra.mxu0 0.0
      %398 = vmatpush.msra.mxu0 0.0
      %399 = vmatpush.msra.mxu0 0.0
      %400 = vmatpush.msra.mxu0 0.0
      %401 = vmatpush.msra.mxu0 0.0
      %402 = vmatpush.msra.mxu0 0.0
      %403 = vmatpush.msra.mxu0 0.0
      %404 = vmatpush.msra.mxu0 0.0
      %405 = vmatpush.msra.mxu0 0.0
      %406 = vmatpush.msra.mxu0 0.0
      %407 = vmatpush.msra.mxu0 %v372
      %408 = vmatpush.msra.mxu0 %v371
      %409 = vmatmul.f32.gmra.mxu0 %v391
      %v410 = vpop.f32.mrf.mxu0
      %v411 = vadd.f32 0.0, %v410
      %412 = vdwg.mxu0
      %v414 = vsel %vm389, %v380, 0
      %416 = vmatpush.msra.mxu0 0.0
      %417 = vmatpush.msra.mxu0 0.0
      %418 = vmatpush.msra.mxu0 0.0
      %419 = vmatpush.msra.mxu0 0.0
      %420 = vmatpush.msra.mxu0 0.0
      %421 = vmatpush.msra.mxu0 0.0
      %422 = vmatpush.msra.mxu0 0.0
      %423 = vmatpush.msra.mxu0 0.0
      %424 = vmatpush.msra.mxu0 0.0
      %425 = vmatpush.msra.mxu0 0.0
      %426 = vmatpush.msra.mxu0 0.0
      %427 = vmatpush.msra.mxu0 0.0
      %428 = vmatpush.msra.mxu0 0.0
      %429 = vmatpush.msra.mxu0 0.0
      %430 = vmatpush.msra.mxu0 %v388
      %431 = vmatpush.msra.mxu0 %v387
      %432 = vmatmul.f32.gmra.mxu0 %v414
      %v433 = vpop.f32.mrf.mxu0
      %v434 = vadd.f32 %v411, %v433
      %435 = vdwg.mxu0
      %v436 = vcvt.s32.f32 %v368
      %v437 = vmax.f32 %v436, 1.0
      %v438 = vrcp.pop %v437
      %v439 = vmul.f32 %v437, %v438
      %v440 = vsub.f32 1.0, %v439
      %v441 = vmul.f32 %v438, %v440
      %v442 = vadd.f32 %v438, %v441
      %vm443 = vweird.f32 %v437
      %vm444 = vweird.f32 %v438
      %vm445 = vmor %vm443, %vm444
      %v446 = vsel %vm445, %v438, %v442
      %v447 = vand.u32 2147483647, %v437
      %vm448 = vcmp.eq.f32.partialorder %v447, 8.507059e+37
      %v449 = vand.u32 %v437, 2147483648
      %v450 = vor.u32 1.1754944e-38, %v449
      %v451 = vsel %vm448, %v450, %v446
      %v452 = vmul.f32 1.0, %v451
      %vm453 = vcmp.gt.s32.totalorder %v368, 0
      %v454 = vsel %vm453, 1, 0
      %v455 = vcvt.s32.f32 %v454
      %v456 = vld [vmem:[%s3] sm:$0xff]
      %vm457 = vcmask 64512
      %v459 = vsel %vm457, %v434, 0
      %461 = vmatpush.msra.mxu0 0.0
      %462 = vmatpush.msra.mxu0 0.0
      %463 = vmatpush.msra.mxu0 0.0
      %464 = vmatpush.msra.mxu0 0.0
      %465 = vmatpush.msra.mxu0 0.0
      %466 = vmatpush.msra.mxu0 0.0
      %467 = vmatpush.msra.mxu0 0.0
      %468 = vmatpush.msra.mxu0 0.0
      %469 = vmatpush.msra.mxu0 0.0
      %470 = vmatpush.msra.mxu0 0.0
      %471 = vmatpush.msra.mxu0 0.0
      %472 = vmatpush.msra.mxu0 0.0
      %473 = vmatpush.msra.mxu0 0.0
      %474 = vmatpush.msra.mxu0 0.0
      %475 = vmatpush.msra.mxu0 0.0
      %476 = vmatpush.msra.mxu0 %v456
      %477 = vmatmul.f32.gmra.mxu0 %v459
      %v478 = vpop.f32.mrf.mxu0
      %v479 = vadd.f32 0.0, %v478
      %480 = vdwg.mxu0
      %482 = vset.pattern.permute.xlu0 1
      %483 = vperm.xlu0 %482, %v452
      %v484 = vpop.permute.xlu0 %483
      %v486 = vmul.f32 %v479, %v484
      %v487 = vld [vmem:[%s4] sm:$0x1]
      %v489 = vperm.slane %v487, 0
      %v491 = vadd.f32 %v486, %v489
      %v492 = vld [vmem:[%s5] sm:$0xff]
      %v493 = vld [vmem:[%s5 + $0x8] sm:$0xff]
      %v494 = vld [vmem:[%s5 + $0x10] sm:$0xff]
      %v495 = vld [vmem:[%s5 + $0x18] sm:$0xff]
      %v496 = vld [vmem:[%s6] sm:$0x1]
      %v498 = vperm.slane %v496, 0
      %vm500 = vcmask 261120
      %v502 = vsel %vm500, %v491, 0
      %504 = vmatpush.msra.mxu0 0.0
      %505 = vmatpush.msra.mxu0 0.0
      %506 = vmatpush.msra.mxu0 0.0
      %507 = vmatpush.msra.mxu0 0.0
      %508 = vmatpush.msra.mxu0 0.0
      %509 = vmatpush.msra.mxu0 0.0
      %510 = vmatpush.msra.mxu0 0.0
      %511 = vmatpush.msra.mxu0 0.0
      %512 = vmatpush.msra.mxu0 0.0
      %513 = vmatpush.msra.mxu0 0.0
      %514 = vmatpush.msra.mxu0 0.0
      %515 = vmatpush.msra.mxu0 0.0
      %516 = vmatpush.msra.mxu0 %v495
      %517 = vmatpush.msra.mxu0 %v494
      %518 = vmatpush.msra.mxu0 %v493
      %519 = vmatpush.msra.mxu0 %v492
      %520 = vmatmul.f32.gmra.mxu0 %v502
      %v521 = vpop.f32.mrf.mxu0
      %v522 = vadd.f32 %v498, %v521
      %523 = vdwg.mxu0
      %v524 = vxor.u32 %v522, 2147483648
      %v525 = vmul.f32 %v524, 1.442695
      %v526 = vpow.pop %v525
      %v527 = vadd.f32 %v526, 1.0
      %v528 = vrcp.pop %v527
      %v529 = vmul.f32 %v527, %v528
      %v530 = vsub.f32 1.0, %v529
      %v531 = vmul.f32 %v528, %v530
      %v532 = vadd.f32 %v528, %v531
      %vm533 = vweird.f32 %v527
      %vm534 = vweird.f32 %v528
      %vm535 = vmor %vm533, %vm534
      %v536 = vsel %vm535, %v528, %v532
      %v537 = vand.u32 2147483647, %v527
      %vm538 = vcmp.eq.f32.partialorder %v537, 8.507059e+37
      %v539 = vand.u32 %v527, 2147483648
      %v540 = vor.u32 1.1754944e-38, %v539
      %v541 = vsel %vm538, %v540, %v536
      %v542 = vmul.f32 1.0, %v541
      %v543 = vmul.f32 %v522, %v542
      %v544 = vadd.f32 %v491, %v543
      %v545 = vld [vmem:[%s7] sm:$0xff]
      %v546 = vld [vmem:[%s7 + $0x8] sm:$0xff]
      %v547 = vld [vmem:[%s7 + $0x10] sm:$0xff]
      %v548 = vld [vmem:[%s7 + $0x18] sm:$0xff]
      %v549 = vld [vmem:[%s8] sm:$0x1]
      %v551 = vperm.slane %v549, 0
      %v554 = vsel %vm500, %v544, 0
      %556 = vmatpush.msra.mxu0 0.0
      %557 = vmatpush.msra.mxu0 0.0
      %558 = vmatpush.msra.mxu0 0.0
      %559 = vmatpush.msra.mxu0 0.0
      %560 = vmatpush.msra.mxu0 0.0
      %561 = vmatpush.msra.mxu0 0.0
      %562 = vmatpush.msra.mxu0 0.0
      %563 = vmatpush.msra.mxu0 0.0
      %564 = vmatpush.msra.mxu0 0.0
      %565 = vmatpush.msra.mxu0 0.0
      %566 = vmatpush.msra.mxu0 0.0
      %567 = vmatpush.msra.mxu0 0.0
      %568 = vmatpush.msra.mxu0 %v548
      %569 = vmatpush.msra.mxu0 %v547
      %570 = vmatpush.msra.mxu0 %v546
      %571 = vmatpush.msra.mxu0 %v545
      %572 = vmatmul.f32.gmra.mxu0 %v554
      %v573 = vpop.f32.mrf.mxu0
      %v574 = vadd.f32 %v551, %v573
      %575 = vdwg.mxu0
      %577 = vset.pattern.permute.xlu0 1
      %578 = vperm.xlu0 %577, %v455
      %v579 = vpop.permute.xlu0 %578
      %v581 = vmul.f32 %v574, %v579
      %582 = vst.msk [vmem:[%s367] sm:$0xff] %vm500, %v581
      %p583 = scmp.lt.s32.totalorder %s20, 1
      %s584 = scalar_select %p583, %s20, 1
      %s585 = smul.addr %s584, 8
      %s586 = scalar_lea.vmem %s9, %s585
      // Predicated region
      $region57: #{qnet_forward.1} parent=55 // pred_check
        %p587 = pneg %p242
      $region58: #{qnet_forward.1} parent=55 // pred_check_branch
        %589 = sbr.rel (%p587) target = $region60
      $region59: #{qnet_forward.1} parent=55 // pred_region
        _
      $region60: #{qnet_forward.1} parent=55 // pred_fallthru
        _
    $region56: #{qnet_forward.1} parent=5 // pred_fallthru
      _
    %p590 = scmp.le.s32.totalorder 2, %s15
    // Predicated region
    $region61: #{qnet_forward.1} parent=5 // pred_check
      %p591 = pneg %p590
    $region62: #{qnet_forward.1} parent=5 // pred_check_branch
      %593 = sbr.rel (%p591) target = $region64
    $region63: #{qnet_forward.1} parent=5 // pred_region
      %s594 = ssub.s32 %s15, 2
      // Predicated region
      $region65: #{qnet_forward.1} parent=63 // pred_check
        %p595 = pneg %p248
      $region66: #{qnet_forward.1} parent=63 // pred_check_branch
        %597 = sbr.rel (%p595) target = $region68
      $region67: #{qnet_forward.1} parent=63 // pred_region
        %p598 = scmp.lt.s32.totalorder %s21, 1
        %s599 = scalar_select %p598, %s21, 1
        %s600 = smul.addr %s599, 8
        %s601 = scalar_lea.vmem %s9, %s600
      $region68: #{qnet_forward.1} parent=63 // pred_fallthru
        _
    $region64: #{qnet_forward.1} parent=5 // pred_fallthru
      _
  $region6: #{qnet_forward.1} parent=0 // loop_footer
    %s19 = sadd.s32 1, %s15
  $region7: #{qnet_forward.1} parent=0 // loop_footer_branch
    %14 = sbr.rel target = $region3
  $region8: #{qnet_forward.1} parent=0 // loop_exit
    _

</llo_original>
